<compile_context>
chip_gen: v5e
topology: v5e:2x2
jax: 0.10.0
libtpu: 0.0.40
codegen_flags: <defaults>
</compile_context>

<pallas_src>
import functools

import jax
import jax.numpy as jnp
from jax.experimental import pallas as pl
from jax.experimental.pallas import tpu as pltpu


def _round_up(x, m):
    return ((x + m - 1) // m) * m


def _vmem_capacity_bytes():
    """Per-TensorCore VMEM capacity; falls back to the smallest (v7x) if unknown."""
    try:
        return int(pltpu.get_tpu_info().vmem_capacity_bytes)
    except Exception:
        return 64 * 1024 * 1024


# --------------------------------------------------------------------------- kernels


def fnn_kernel_resident(x_ref, w1_ref, b1_ref, w2_ref, b2_ref, o_ref):
    """Whole hidden dim resident: one grid step per row tile, no scratch accumulator."""
    x = x_ref[...].astype(w1_ref.dtype)          # cast on the VPU, not as an XLA pass
    h = jnp.dot(x, w1_ref[...], preferred_element_type=jnp.float32)
    h = jnp.maximum(h + b1_ref[...], 0.0)        # bias + ReLU in f32
    o = jnp.dot(h.astype(w2_ref.dtype), w2_ref[...],
                preferred_element_type=jnp.float32)
    o_ref[...] = (o + b2_ref[...]).astype(o_ref.dtype)


def fnn_kernel_tiled(x_ref, w1_ref, b1_ref, w2_ref, b2_ref, o_ref, acc_ref):
    """Hidden dim tiled on grid axis 1 (reduction axis last) with an f32 accumulator."""
    h_idx = pl.program_id(1)

    @pl.when(h_idx == 0)
    def _():
        acc_ref[...] = jnp.zeros_like(acc_ref)

    x = x_ref[...].astype(w1_ref.dtype)
    h = jnp.dot(x, w1_ref[...], preferred_element_type=jnp.float32)
    h = jnp.maximum(h + b1_ref[...], 0.0)
    acc_ref[...] += jnp.dot(h.astype(w2_ref.dtype), w2_ref[...],
                            preferred_element_type=jnp.float32)

    @pl.when(h_idx == pl.num_programs(1) - 1)
    def _():
        o_ref[...] = (acc_ref[...] + b2_ref[...]).astype(o_ref.dtype)


# --------------------------------------------------------------------- sizing helpers


def _vmem_estimate(m_tile, k, th, hidden_pad, out_pad, x_bytes, w_bytes, o_bytes):
    """Rough VMEM footprint in bytes for a given (row tile, hidden tile) choice."""
    resident = th == hidden_pad
    wbuf = 1 if resident else 2                   # Buffered(1) on constant weight blocks
    est = 2 * m_tile * k * x_bytes                # x row tile (double-buffered)
    est += wbuf * (k * th * w_bytes + 8 * th * 4)            # W1 + b1 (sublane-padded)
    est += wbuf * th * out_pad * w_bytes                      # W2
    est += 8 * out_pad * 4                                    # b2 (single buffer)
    est += 2 * m_tile * out_pad * o_bytes                     # out tile (double-buffered)
    if not resident:
        est += m_tile * out_pad * 4                           # f32 accumulator scratch
    # transient in-kernel temporaries: bf16 x cast, f32 hidden, bf16 hidden cast
    est += m_tile * k * w_bytes + m_tile * th * (4 + w_bytes)
    return est


def prepare_fnn_params(w1, b1, w2, b2, compute_dtype=jnp.bfloat16):
    """One-time weight cast + lane-pad (hoisted out of the per-call forward).

    w1: (input_dim, hidden_dim), b1: (hidden_dim,), w2: (hidden_dim, out_dim),
    b2: (out_dim,). Padded hidden units are exact (relu(0)=0 against zero W2 rows);
    padded output columns are sliced off by fnn_forward.
    """
    input_dim, hidden_dim = w1.shape
    out_dim = w2.shape[1]
    hidden_pad = _round_up(hidden_dim, 128)
    out_pad = _round_up(out_dim, 128)

    b1 = jnp.reshape(b1, (1, hidden_dim)).astype(jnp.float32)
    b2 = jnp.reshape(b2, (1, out_dim)).astype(jnp.float32)
    w1p = jnp.pad(w1.astype(compute_dtype), ((0, 0), (0, hidden_pad - hidden_dim)))
    b1p = jnp.pad(b1, ((0, 0), (0, hidden_pad - hidden_dim)))
    w2p = jnp.pad(w2.astype(compute_dtype),
                  ((0, hidden_pad - hidden_dim), (0, out_pad - out_dim)))
    b2p = jnp.pad(b2, ((0, 0), (0, out_pad - out_dim)))
    return w1p, b1p, w2p, b2p


# ---------------------------------------------------------------------------- forward


@functools.partial(jax.jit, static_argnames=("out_dim", "tm", "th"))
def fnn_forward(x, w1p, b1p, w2p, b2p, *, out_dim, tm=256, th=None):
    """x: (batch, seq, input_dim) -> (batch, seq, out_dim).

    w1p/b1p/w2p/b2p come from prepare_fnn_params (pre-cast, lane-padded).
    tm: row tile (multiple of 8; 256 default to fill the 256-wide MXUs on v6e/v7x).
    th: hidden tile (multiple of 128 dividing the padded hidden dim); None = auto.
    """
    batch, seq, input_dim = x.shape
    hidden_pad = w1p.shape[1]
    out_pad = w2p.shape[1]
    out_dtype = x.dtype
    compute_dtype = w1p.dtype

    m = batch * seq
    x_bytes = jnp.dtype(x.dtype).itemsize
    w_bytes = jnp.dtype(compute_dtype).itemsize
    o_bytes = jnp.dtype(out_dtype).itemsize

    # Generation-aware VMEM budget: 3/4 of per-core capacity (≈48 MiB on v7x,
    # ≈96 MiB on v5e/v6e), with a little headroom left for Mosaic internal scratch.
    vmem_limit = (_vmem_capacity_bytes() * 3) // 4
    budget = max(vmem_limit - (2 << 20), 8 << 20)

    # Row tile: don't over-allocate for tiny M; shrink if even th=128 busts the budget.
    m_tile = min(tm, _round_up(m, 8))
    while m_tile > 128 and _vmem_estimate(
            m_tile, input_dim, min(128, hidden_pad), hidden_pad, out_pad,
            x_bytes, w_bytes, o_bytes) > budget:
        m_tile = max(128, _round_up(m_tile // 2, 8))

    # Hidden tile: largest divisor of hidden_pad (in units of 128) that fits the budget
    # -> prefers the fully-resident single-tile path (no weight re-streaming per row tile).
    if th is None:
        n128 = hidden_pad // 128
        th_sel = 128
        for d in sorted((d for d in range(1, n128 + 1) if n128 % d == 0), reverse=True):
            cand = d * 128
            if _vmem_estimate(m_tile, input_dim, cand, hidden_pad, out_pad,
                              x_bytes, w_bytes, o_bytes) <= budget:
                th_sel = cand
                break
    else:
        th_sel = max(128, _round_up(min(th, hidden_pad), 128))
        while hidden_pad % th_sel:
            th_sel -= 128

    n_row = -(-m // m_tile)
    n_h = hidden_pad // th_sel
    resident = n_h == 1

    x2d = x.reshape(m, input_dim)   # no cast here — the kernel casts on the VPU

    weight_fetches = 1 if resident else n_row
    cost = pl.CostEstimate(
        flops=int(2 * m * hidden_pad * (input_dim + out_pad)),
        transcendentals=0,
        bytes_accessed=int(m * input_dim * x_bytes + m * out_pad * o_bytes
                           + weight_fetches * (input_dim * hidden_pad * w_bytes
                                               + hidden_pad * out_pad * w_bytes
                                               + hidden_pad * 4 + out_pad * 4)),
    )

    if resident:
        out2d = pl.pallas_call(
            fnn_kernel_resident,
            out_shape=jax.ShapeDtypeStruct((m, out_pad), out_dtype),
            grid_spec=pltpu.PrefetchScalarGridSpec(
                num_scalar_prefetch=0,
                grid=(n_row,),
                in_specs=[
                    pl.BlockSpec((m_tile, input_dim), lambda i: (i, 0)),
                    # Constant index_map blocks: single-buffered (no wasted 2x VMEM).
                    pl.BlockSpec((input_dim, hidden_pad), lambda i: (0, 0),
                                 pipeline_mode=pl.Buffered(1)),
                    pl.BlockSpec((1, hidden_pad), lambda i: (0, 0),
                                 pipeline_mode=pl.Buffered(1)),
                    pl.BlockSpec((hidden_pad, out_pad), lambda i: (0, 0),
                                 pipeline_mode=pl.Buffered(1)),
                    pl.BlockSpec((1, out_pad), lambda i: (0, 0),
                                 pipeline_mode=pl.Buffered(1)),
                ],
                out_specs=pl.BlockSpec((m_tile, out_pad), lambda i: (i, 0)),
            ),
            compiler_params=pltpu.CompilerParams(
                dimension_semantics=("parallel",),
                vmem_limit_bytes=int(vmem_limit),
            ),
            cost_estimate=cost,
        )(x2d, w1p, b1p, w2p, b2p)
    else:
        out2d = pl.pallas_call(
            fnn_kernel_tiled,
            out_shape=jax.ShapeDtypeStruct((m, out_pad), out_dtype),
            grid_spec=pltpu.PrefetchScalarGridSpec(
                num_scalar_prefetch=0,
                grid=(n_row, n_h),
                in_specs=[
                    pl.BlockSpec((m_tile, input_dim), lambda i, h: (i, 0)),
                    pl.BlockSpec((input_dim, th_sel), lambda i, h: (0, h)),
                    pl.BlockSpec((1, th_sel), lambda i, h: (0, h)),
                    pl.BlockSpec((th_sel, out_pad), lambda i, h: (h, 0)),
                    pl.BlockSpec((1, out_pad), lambda i, h: (0, 0),
                                 pipeline_mode=pl.Buffered(1)),
                ],
                out_specs=pl.BlockSpec((m_tile, out_pad), lambda i, h: (i, 0)),
                scratch_shapes=[pltpu.VMEM((m_tile, out_pad), jnp.float32)],
            ),
            compiler_params=pltpu.CompilerParams(
                dimension_semantics=("parallel", "arbitrary"),
                vmem_limit_bytes=int(vmem_limit),
            ),
            cost_estimate=cost,
        )(x2d, w1p, b1p, w2p, b2p)

    if out_pad != out_dim:
        out2d = out2d[:, :out_dim]
    return out2d.reshape(batch, seq, out_dim)


# ------------------------------------------------------------------------ init / ref


def init_fnn_params(key, input_dim, hidden_dim, out_dim, dtype=jnp.float32):
    """nn.Linear-style U(-1/sqrt(fan_in), 1/sqrt(fan_in)) init; weights pre-transposed
    to (in, out) so the kernel runs plain (M, K) @ (K, N) matmuls."""
    k1, k2, k3, k4 = jax.random.split(key, 4)
    lim1 = 1.0 / jnp.sqrt(input_dim)
    lim2 = 1.0 / jnp.sqrt(hidden_dim)
    w1 = jax.random.uniform(k1, (input_dim, hidden_dim), dtype, -lim1, lim1)
    b1 = jax.random.uniform(k2, (hidden_dim,), dtype, -lim1, lim1)
    w2 = jax.random.uniform(k3, (hidden_dim, out_dim), dtype, -lim2, lim2)
    b2 = jax.random.uniform(k4, (out_dim,), dtype, -lim2, lim2)
    return w1, b1, w2, b2


def fnn_reference(x, w1, b1, w2, b2, compute_dtype=jnp.bfloat16):
    """Plain-JAX reference using the same mixed-precision recipe as the kernel."""
    cd = compute_dtype
    h = jnp.dot(x.astype(cd), w1.astype(cd), preferred_element_type=jnp.float32)
    h = jnp.maximum(h + b1.astype(jnp.float32), 0.0)
    o = jnp.dot(h.astype(cd), w2.astype(cd), preferred_element_type=jnp.float32)
    o = o + b2.astype(jnp.float32)
    return o.astype(x.dtype)


if __name__ == "__main__":
    batch, seq = 2, 8
    input_dim, hidden_dim = 128, 256
    out_dim = input_dim  # FNN default: out_dim = input_dim

    key = jax.random.PRNGKey(0)
    kx, kp = jax.random.split(key)
    x = jax.random.normal(kx, (batch, seq, input_dim), dtype=jnp.float32)
    w1, b1, w2, b2 = init_fnn_params(kp, input_dim, hidden_dim, out_dim)

    # One-time weight preparation (cast + lane-pad), hoisted out of the forward pass.
    w1p, b1p, w2p, b2p = prepare_fnn_params(w1, b1, w2, b2)

    ref = fnn_reference(x, w1, b1, w2, b2)

    # 1) Resident-weight fast path (single hidden tile, no accumulator scratch).
    out = jax.block_until_ready(fnn_forward(x, w1p, b1p, w2p, b2p, out_dim=out_dim))
    assert out.shape == (batch, seq, out_dim)
    assert jnp.allclose(out, ref, atol=2e-2, rtol=2e-2), "resident path mismatch"

    # 2) Hidden-dim-tiled reduction path (used automatically when weights exceed the
    #    VMEM budget; forced here via th=128 for coverage).
    out_tiled = jax.block_until_ready(
        fnn_forward(x, w1p, b1p, w2p, b2p, out_dim=out_dim, th=128))
    assert out_tiled.shape == (batch, seq, out_dim)
    assert jnp.allclose(out_tiled, ref, atol=2e-2, rtol=2e-2), "tiled path mismatch"

    print("KERNEL_OK")
</pallas_src>

<mosaic_0001>
module attributes {stable_mosaic.version = 11 : i64} {
  func.func @fnn_kernel_resident(%arg0: i32, %arg1: memref<16x128xf32, #tpu.memory_space<vmem>>, %arg2: memref<128x256xbf16, #tpu.memory_space<vmem>>, %arg3: memref<1x256xf32, #tpu.memory_space<vmem>>, %arg4: memref<256x128xbf16, #tpu.memory_space<vmem>>, %arg5: memref<1x128xf32, #tpu.memory_space<vmem>>, %arg6: memref<16x128xf32, #tpu.memory_space<vmem>>) attributes {dimension_semantics = [#tpu.dimension_semantics<parallel>], iteration_bounds = array<i64: 1>, scalar_prefetch = 0 : i64, scratch_operands = 0 : i64, tpu.core_type = #tpu.core_type<tc>, window_params = [{transform_indices = @transform_0, window_bounds = array<i64: 16, 128>}, {pipeline_mode = #tpu.pipeline_mode<synchronous>, transform_indices = @transform_1, window_bounds = array<i64: 128, 256>}, {pipeline_mode = #tpu.pipeline_mode<synchronous>, transform_indices = @transform_2, window_bounds = array<i64: 1, 256>}, {pipeline_mode = #tpu.pipeline_mode<synchronous>, transform_indices = @transform_3, window_bounds = array<i64: 256, 128>}, {pipeline_mode = #tpu.pipeline_mode<synchronous>, transform_indices = @transform_4, window_bounds = array<i64: 1, 128>}, {transform_indices = @transform_5, window_bounds = array<i64: 16, 128>}]} {
    %c0 = arith.constant 0 : index
    %c0_0 = arith.constant 0 : index
    %0 = vector.load %arg1[%c0, %c0_0] : memref<16x128xf32, #tpu.memory_space<vmem>>, vector<16x128xf32>
    %1 = arith.truncf %0 : vector<16x128xf32> to vector<16x128xbf16>
    %c0_1 = arith.constant 0 : index
    %c0_2 = arith.constant 0 : index
    %2 = vector.load %arg2[%c0_1, %c0_2] : memref<128x256xbf16, #tpu.memory_space<vmem>>, vector<128x256xbf16>
    %cst = arith.constant dense<0.000000e+00> : vector<16x256xf32>
    %3 = tpu.matmul %1, %2, %cst {dimension_numbers = #tpu.dot_dimension_numbers<[1], [0], [0], [1], [0, 0, 1, 1], [], []>} : vector<16x128xbf16>, vector<128x256xbf16>, vector<16x256xf32> -> vector<16x256xf32>
    %c0_3 = arith.constant 0 : index
    %c0_4 = arith.constant 0 : index
    %4 = vector.load %arg3[%c0_3, %c0_4] : memref<1x256xf32, #tpu.memory_space<vmem>>, vector<1x256xf32>
    %5 = vector.broadcast %4 : vector<1x256xf32> to vector<16x256xf32>
    %6 = arith.addf %3, %5 : vector<16x256xf32>
    %cst_5 = arith.constant 0.000000e+00 : f32
    %7 = vector.broadcast %cst_5 : f32 to vector<16x256xf32>
    %8 = arith.maximumf %6, %7 : vector<16x256xf32>
    %9 = arith.truncf %8 : vector<16x256xf32> to vector<16x256xbf16>
    %c0_6 = arith.constant 0 : index
    %c0_7 = arith.constant 0 : index
    %10 = vector.load %arg4[%c0_6, %c0_7] : memref<256x128xbf16, #tpu.memory_space<vmem>>, vector<256x128xbf16>
    %cst_8 = arith.constant dense<0.000000e+00> : vector<16x128xf32>
    %11 = tpu.matmul %9, %10, %cst_8 {dimension_numbers = #tpu.dot_dimension_numbers<[1], [0], [0], [1], [0, 0, 1, 1], [], []>} : vector<16x256xbf16>, vector<256x128xbf16>, vector<16x128xf32> -> vector<16x128xf32>
    %c0_9 = arith.constant 0 : index
    %c0_10 = arith.constant 0 : index
    %12 = vector.load %arg5[%c0_9, %c0_10] : memref<1x128xf32, #tpu.memory_space<vmem>>, vector<1x128xf32>
    %13 = vector.broadcast %12 : vector<1x128xf32> to vector<16x128xf32>
    %14 = arith.addf %11, %13 : vector<16x128xf32>
    %c0_11 = arith.constant 0 : index
    %c0_12 = arith.constant 0 : index
    %15 = vector.load %arg6[%c0_11, %c0_12] : memref<16x128xf32, #tpu.memory_space<vmem>>, vector<16x128xf32>
    tpu.vector_store %arg6[%c0_11, %c0_12], %14 {strides = array<i32>} : memref<16x128xf32, #tpu.memory_space<vmem>>, vector<16x128xf32>,
    return
  }
  func.func @transform_0(%arg0: i32) -> (i32, i32) {
    %c0_i32 = arith.constant 0 : i32
    %c0_i32_0 = arith.constant 0 : i32
    return %arg0, %c0_i32 : i32, i32
  }
  func.func @transform_1(%arg0: i32) -> (i32, i32) {
    %c0_i32 = arith.constant 0 : i32
    %c0_i32_0 = arith.constant 0 : i32
    %c0_i32_1 = arith.constant 0 : i32
    return %c0_i32, %c0_i32_0 : i32, i32
  }
  func.func @transform_2(%arg0: i32) -> (i32, i32) {
    %c0_i32 = arith.constant 0 : i32
    %c0_i32_0 = arith.constant 0 : i32
    %c0_i32_1 = arith.constant 0 : i32
    return %c0_i32, %c0_i32_0 : i32, i32
  }
  func.func @transform_3(%arg0: i32) -> (i32, i32) {
    %c0_i32 = arith.constant 0 : i32
    %c0_i32_0 = arith.constant 0 : i32
    %c0_i32_1 = arith.constant 0 : i32
    return %c0_i32, %c0_i32_0 : i32, i32
  }
  func.func @transform_4(%arg0: i32) -> (i32, i32) {
    %c0_i32 = arith.constant 0 : i32
    %c0_i32_0 = arith.constant 0 : i32
    %c0_i32_1 = arith.constant 0 : i32
    return %c0_i32, %c0_i32_0 : i32, i32
  }
  func.func @transform_5(%arg0: i32) -> (i32, i32) {
    %c0_i32 = arith.constant 0 : i32
    %c0_i32_0 = arith.constant 0 : i32
    return %arg0, %c0_i32 : i32, i32
  }
}

</mosaic_0001>

<llo_original>
// kernel: fnn_forward.1
$region0: #{fnn_forward.1}
  #allocation0 [shape = 'u32[]', space=smem, size = 0x4, offset = 0x4, fixed_abs, tag = 'smem constant byte address 0x4 - core index']
  #allocation1 [shape = 'u32[72,128]{1,0:T(1,128)}', space=vmem, size = 0x9000, scoped, tag = 'internal scratch']
  %s0 = inlined_call_operand.hbm [shape: f32[16,128], index: 0, kind: input, shape index: {}]
  %s1 = inlined_call_operand.hbm [shape: bf16[128,256], index: 1, kind: input, shape index: {}]
  %s2 = inlined_call_operand.vmem [shape: f32[1,256], index: 2, kind: input, shape index: {}]
  %s3 = inlined_call_operand.hbm [shape: bf16[256,128], index: 3, kind: input, shape index: {}]
  %s4 = inlined_call_operand.vmem [shape: f32[1,128], index: 4, kind: input, shape index: {}]
  %s5 = inlined_call_operand.hbm [shape: f32[16,128], index: 5, kind: output, shape index: {}]
  %s6 = sld [smem:[#allocation0]]
  $region42: #{fnn_forward.1} parent=0
    _
  %s8 = ssub.s32 1, %s6
  %s9 = scalar_select 0, %s8, %s6
  $region1: #{fnn_forward.1} parent=0
    #allocation2 [shape = 'u8[8192]{0}', space=vmem, size = 0x2000, scoped, tag = 'input window, operand 0, single buffered']
    #allocation3 [shape = 's32[1]{0}', space=sflag, size = 0x4, scoped, tag = 'scoped memory for fnn_forward.1']
    #allocation4 [shape = 's32[1]{0}', space=sflag, size = 0x4, scoped, tag = 'scoped memory for fnn_forward.1']
    #allocation5 [shape = 'u8[65536]{0}', space=vmem, size = 0x10000, scoped, tag = 'input window, operand 1, single buffered']
    #allocation6 [shape = 's32[1]{0}', space=sflag, size = 0x4, scoped, tag = 'scoped memory for fnn_forward.1']
    #allocation7 [shape = 'u8[65536]{0}', space=vmem, size = 0x10000, scoped, tag = 'input window, operand 3, single buffered']
    #allocation8 [shape = 'u8[8192]{0}', space=vmem, size = 0x2000, scoped, tag = 'output window, operand 0, single buffered']
    %10 = vsyncpa [#allocation3], 0
    %11 = vsyncpa [#allocation6], 0
    %12 = vsyncpa [#allocation4], 0
    // Predicated region
    $region2: #{fnn_forward.1} parent=1 // pred_check
      _
    $region3: #{fnn_forward.1} parent=1 // pred_check_branch
      %14 = sbr.rel (0) target = $region5
    $region4: #{fnn_forward.1} parent=1 // pred_region
      %16 = vsyncadd [#allocation3], 0
      %s17 = sshll.u32 %s0, 4
      %s18 = int_to_ptr.hbm [resolvable:$true] %s17
      %s19 = sshll.u32 [#allocation2], 4
      %s20 = int_to_ptr.vmem [resolvable:$true] %s19
      %25 = dma.hbm_to_vmem [thread:$0]  %s18, 256, %s20, [#allocation3], 128, 128, 8
    $region5: #{fnn_forward.1} parent=1 // pred_fallthru
      _
    // Predicated region
    $region6: #{fnn_forward.1} parent=1 // pred_check
      _
    $region7: #{fnn_forward.1} parent=1 // pred_check_branch
      %27 = sbr.rel (0) target = $region9
    $region8: #{fnn_forward.1} parent=1 // pred_region
      %29 = vsyncadd [#allocation6], 0
      %s30 = sshll.u32 %s1, 4
      %s31 = int_to_ptr.hbm [resolvable:$true] %s30
      %s32 = sshll.u32 [#allocation5], 4
      %s33 = int_to_ptr.vmem [resolvable:$true] %s32
      %38 = dma.hbm_to_vmem [thread:$0]  %s31, 2048, %s33, [#allocation6], 128, 128, 8
    $region9: #{fnn_forward.1} parent=1 // pred_fallthru
      _
    // Predicated region
    $region10: #{fnn_forward.1} parent=1 // pred_check
      _
    $region11: #{fnn_forward.1} parent=1 // pred_check_branch
      %40 = sbr.rel (0) target = $region13
    $region12: #{fnn_forward.1} parent=1 // pred_region
      _
    $region13: #{fnn_forward.1} parent=1 // pred_fallthru
      _
    // Predicated region
    $region14: #{fnn_forward.1} parent=1 // pred_check
      _
    $region15: #{fnn_forward.1} parent=1 // pred_check_branch
      %42 = sbr.rel (0) target = $region17
    $region16: #{fnn_forward.1} parent=1 // pred_region
      %44 = vsyncadd [#allocation6], 0
      %s45 = sshll.u32 %s3, 4
      %s46 = int_to_ptr.hbm [resolvable:$true] %s45
      %s47 = sshll.u32 [#allocation7], 4
      %s48 = int_to_ptr.vmem [resolvable:$true] %s47
      %53 = dma.hbm_to_vmem [thread:$0]  %s46, 2048, %s48, [#allocation6], 64, 64, 4
    $region17: #{fnn_forward.1} parent=1 // pred_fallthru
      _
    // Predicated region
    $region18: #{fnn_forward.1} parent=1 // pred_check
      _
    $region19: #{fnn_forward.1} parent=1 // pred_check_branch
      %55 = sbr.rel (0) target = $region21
    $region20: #{fnn_forward.1} parent=1 // pred_region
      _
    $region21: #{fnn_forward.1} parent=1 // pred_fallthru
      _
    // Predicated region
    $region22: #{fnn_forward.1} parent=1 // pred_check
      _
    $region23: #{fnn_forward.1} parent=1 // pred_check_branch
      %57 = sbr.rel (0) target = $region25
    $region24: #{fnn_forward.1} parent=1 // pred_region
      %59 = dma.done [#allocation3], 256
    $region25: #{fnn_forward.1} parent=1 // pred_fallthru
      _
    // Predicated region
    $region26: #{fnn_forward.1} parent=1 // pred_check
      _
    $region27: #{fnn_forward.1} parent=1 // pred_check_branch
      %61 = sbr.rel (0) target = $region29
    $region28: #{fnn_forward.1} parent=1 // pred_region
      %63 = dma.done [#allocation6], 2048
    $region29: #{fnn_forward.1} parent=1 // pred_fallthru
      _
    // Predicated region
    $region30: #{fnn_forward.1} parent=1 // pred_check
      _
    $region31: #{fnn_forward.1} parent=1 // pred_check_branch
      %65 = sbr.rel (0) target = $region33
    $region32: #{fnn_forward.1} parent=1 // pred_region
      %67 = dma.done [#allocation6], 2048
    $region33: #{fnn_forward.1} parent=1 // pred_fallthru
      _
    %v68 = vld [vmem:[#allocation2] sm:$0xff]
    %v69 = vld [vmem:[#allocation2 + $0x8] sm:$0xff]
    %v70 = vpack.c.bf16 %v69, %v68
    %v71 = vld [vmem:[#allocation5] sm:$0xff]
    %v72 = vld [vmem:[#allocation5 + $0x8] sm:$0xff]
    %v73 = vld [vmem:[#allocation5 + $0x10] sm:$0xff]
    %v74 = vld [vmem:[#allocation5 + $0x18] sm:$0xff]
    %v75 = vld [vmem:[#allocation5 + $0x20] sm:$0xff]
    %v76 = vld [vmem:[#allocation5 + $0x28] sm:$0xff]
    %v77 = vld [vmem:[#allocation5 + $0x30] sm:$0xff]
    %v78 = vld [vmem:[#allocation5 + $0x38] sm:$0xff]
    %v79 = vld [vmem:[#allocation5 + $0x40] sm:$0xff]
    %v80 = vld [vmem:[#allocation5 + $0x48] sm:$0xff]
    %v81 = vld [vmem:[#allocation5 + $0x50] sm:$0xff]
    %v82 = vld [vmem:[#allocation5 + $0x58] sm:$0xff]
    %v83 = vld [vmem:[#allocation5 + $0x60] sm:$0xff]
    %v84 = vld [vmem:[#allocation5 + $0x68] sm:$0xff]
    %v85 = vld [vmem:[#allocation5 + $0x70] sm:$0xff]
    %v86 = vld [vmem:[#allocation5 + $0x78] sm:$0xff]
    %v87 = vld [vmem:[%s2] sm:$0x3]
    %v89 = vperm.slane %v87, 0
    %v90 = vperm.slane %v87, 1
    %v109 = vunpack.c.l.b16 %v71
    %v110 = vunpack.c.h.b16 %v71
    %v111 = vunpack.c.l.b16 %v72
    %v112 = vunpack.c.h.b16 %v72
    %v113 = vunpack.c.l.b16 %v73
    %v114 = vunpack.c.h.b16 %v73
    %v115 = vunpack.c.l.b16 %v74
    %v116 = vunpack.c.h.b16 %v74
    %v117 = vunpack.c.l.b16 %v75
    %v118 = vunpack.c.h.b16 %v75
    %v119 = vunpack.c.l.b16 %v76
    %v120 = vunpack.c.h.b16 %v76
    %v121 = vunpack.c.l.b16 %v77
    %v122 = vunpack.c.h.b16 %v77
    %v123 = vunpack.c.l.b16 %v78
    %v124 = vunpack.c.h.b16 %v78
    %v125 = vunpack.c.l.b16 %v79
    %v126 = vunpack.c.h.b16 %v79
    %v127 = vunpack.c.l.b16 %v80
    %v128 = vunpack.c.h.b16 %v80
    %v129 = vunpack.c.l.b16 %v81
    %v130 = vunpack.c.h.b16 %v81
    %v131 = vunpack.c.l.b16 %v82
    %v132 = vunpack.c.h.b16 %v82
    %v133 = vunpack.c.l.b16 %v83
    %v134 = vunpack.c.h.b16 %v83
    %v135 = vunpack.c.l.b16 %v84
    %v136 = vunpack.c.h.b16 %v84
    %v137 = vunpack.c.l.b16 %v85
    %v138 = vunpack.c.h.b16 %v85
    %v139 = vunpack.c.l.b16 %v86
    %v140 = vunpack.c.h.b16 %v86
    %v141 = vpack.c.b16 %v111, %v109
    %v142 = vpack.c.b16 %v112, %v110
    %v143 = vpack.c.b16 %v115, %v113
    %v144 = vpack.c.b16 %v116, %v114
    %v145 = vpack.c.b16 %v119, %v117
    %v146 = vpack.c.b16 %v120, %v118
    %v147 = vpack.c.b16 %v123, %v121
    %v148 = vpack.c.b16 %v124, %v122
    %v149 = vpack.c.b16 %v127, %v125
    %v150 = vpack.c.b16 %v128, %v126
    %v151 = vpack.c.b16 %v131, %v129
    %v152 = vpack.c.b16 %v132, %v130
    %v153 = vpack.c.b16 %v135, %v133
    %v154 = vpack.c.b16 %v136, %v134
    %v155 = vpack.c.b16 %v139, %v137
    %v156 = vpack.c.b16 %v140, %v138
    %173 = vmatpush.bf16.msra.mxu0 %v155
    %174 = vmatpush.bf16.msra.mxu0 %v153
    %175 = vmatpush.bf16.msra.mxu0 %v151
    %176 = vmatpush.bf16.msra.mxu0 %v149
    %177 = vmatpush.bf16.msra.mxu0 %v147
    %178 = vmatpush.bf16.msra.mxu0 %v145
    %179 = vmatpush.bf16.msra.mxu0 %v143
    %180 = vmatpush.bf16.msra.mxu0 %v141
    %181 = vmatmul.bf16.gmra.mxu0 %v70
    %v182 = vpop.f32.mrf.mxu0
    %v183 = vadd.f32 %v89, %v182
    %v184 = vpop.f32.mrf.mxu0
    %v185 = vadd.f32 %v89, %v184
    %186 = vdwg.mxu0
    %187 = vmatpush.bf16.msra.mxu0 %v156
    %188 = vmatpush.bf16.msra.mxu0 %v154
    %189 = vmatpush.bf16.msra.mxu0 %v152
    %190 = vmatpush.bf16.msra.mxu0 %v150
    %191 = vmatpush.bf16.msra.mxu0 %v148
    %192 = vmatpush.bf16.msra.mxu0 %v146
    %193 = vmatpush.bf16.msra.mxu0 %v144
    %194 = vmatpush.bf16.msra.mxu0 %v142
    %195 = vmatmul.bf16.gmra.mxu0 %v70
    %v196 = vpop.f32.mrf.mxu0
    %v197 = vadd.f32 %v90, %v196
    %v198 = vpop.f32.mrf.mxu0
    %v199 = vadd.f32 %v90, %v198
    %200 = vdwg.mxu0
    %v201 = vmax.f32 %v183, 0.0
    %v202 = vmax.f32 %v197, 0.0
    %v203 = vmax.f32 %v185, 0.0
    %v204 = vmax.f32 %v199, 0.0
    %v205 = vpack.c.bf16 %v203, %v201
    %v206 = vpack.c.bf16 %v204, %v202
    %v207 = vld [vmem:[#allocation7] sm:$0xf]
    %v208 = vld [vmem:[#allocation7 + $0x4] sm:$0xf]
    %v209 = vld [vmem:[#allocation7 + $0x8] sm:$0xf]
    %v210 = vld [vmem:[#allocation7 + $0xc] sm:$0xf]
    %v211 = vld [vmem:[#allocation7 + $0x10] sm:$0xf]
    %v212 = vld [vmem:[#allocation7 + $0x14] sm:$0xf]
    %v213 = vld [vmem:[#allocation7 + $0x18] sm:$0xf]
    %v214 = vld [vmem:[#allocation7 + $0x1c] sm:$0xf]
    %v215 = vld [vmem:[#allocation7 + $0x20] sm:$0xf]
    %v216 = vld [vmem:[#allocation7 + $0x24] sm:$0xf]
    %v217 = vld [vmem:[#allocation7 + $0x28] sm:$0xf]
    %v218 = vld [vmem:[#allocation7 + $0x2c] sm:$0xf]
    %v219 = vld [vmem:[#allocation7 + $0x30] sm:$0xf]
    %v220 = vld [vmem:[#allocation7 + $0x34] sm:$0xf]
    %v221 = vld [vmem:[#allocation7 + $0x38] sm:$0xf]
    %v222 = vld [vmem:[#allocation7 + $0x3c] sm:$0xf]
    %v223 = vld [vmem:[#allocation7 + $0x40] sm:$0xf]
    %v224 = vld [vmem:[#allocation7 + $0x44] sm:$0xf]
    %v225 = vld [vmem:[#allocation7 + $0x48] sm:$0xf]
    %v226 = vld [vmem:[#allocation7 + $0x4c] sm:$0xf]
    %v227 = vld [vmem:[#allocation7 + $0x50] sm:$0xf]
    %v228 = vld [vmem:[#allocation7 + $0x54] sm:$0xf]
    %v229 = vld [vmem:[#allocation7 + $0x58] sm:$0xf]
    %v230 = vld [vmem:[#allocation7 + $0x5c] sm:$0xf]
    %v231 = vld [vmem:[#allocation7 + $0x60] sm:$0xf]
    %v232 = vld [vmem:[#allocation7 + $0x64] sm:$0xf]
    %v233 = vld [vmem:[#allocation7 + $0x68] sm:$0xf]
    %v234 = vld [vmem:[#allocation7 + $0x6c] sm:$0xf]
    %v235 = vld [vmem:[#allocation7 + $0x70] sm:$0xf]
    %v236 = vld [vmem:[#allocation7 + $0x74] sm:$0xf]
    %v237 = vld [vmem:[#allocation7 + $0x78] sm:$0xf]
    %v238 = vld [vmem:[#allocation7 + $0x7c] sm:$0xf]
    %v239 = vld [vmem:[%s4] sm:$0x1]
    %v241 = vperm.slane %v239, 0
    %v275 = vunpack.c.l.b16 %v207
    %v276 = vunpack.c.l.b16 %v208
    %v277 = vunpack.c.l.b16 %v209
    %v278 = vunpack.c.l.b16 %v210
    %v279 = vunpack.c.l.b16 %v211
    %v280 = vunpack.c.l.b16 %v212
    %v281 = vunpack.c.l.b16 %v213
    %v282 = vunpack.c.l.b16 %v214
    %v283 = vunpack.c.l.b16 %v215
    %v284 = vunpack.c.l.b16 %v216
    %v285 = vunpack.c.l.b16 %v217
    %v286 = vunpack.c.l.b16 %v218
    %v287 = vunpack.c.l.b16 %v219
    %v288 = vunpack.c.l.b16 %v220
    %v289 = vunpack.c.l.b16 %v221
    %v290 = vunpack.c.l.b16 %v222
    %v291 = vunpack.c.l.b16 %v223
    %v292 = vunpack.c.l.b16 %v224
    %v293 = vunpack.c.l.b16 %v225
    %v294 = vunpack.c.l.b16 %v226
    %v295 = vunpack.c.l.b16 %v227
    %v296 = vunpack.c.l.b16 %v228
    %v297 = vunpack.c.l.b16 %v229
    %v298 = vunpack.c.l.b16 %v230
    %v299 = vunpack.c.l.b16 %v231
    %v300 = vunpack.c.l.b16 %v232
    %v301 = vunpack.c.l.b16 %v233
    %v302 = vunpack.c.l.b16 %v234
    %v303 = vunpack.c.l.b16 %v235
    %v304 = vunpack.c.l.b16 %v236
    %v305 = vunpack.c.l.b16 %v237
    %v306 = vunpack.c.l.b16 %v238
    %v307 = vpack.c.b16 %v276, %v275
    %v308 = vpack.c.b16 %v278, %v277
    %v309 = vpack.c.b16 %v280, %v279
    %v310 = vpack.c.b16 %v282, %v281
    %v311 = vpack.c.b16 %v284, %v283
    %v312 = vpack.c.b16 %v286, %v285
    %v313 = vpack.c.b16 %v288, %v287
    %v314 = vpack.c.b16 %v290, %v289
    %v315 = vpack.c.b16 %v292, %v291
    %v316 = vpack.c.b16 %v294, %v293
    %v317 = vpack.c.b16 %v296, %v295
    %v318 = vpack.c.b16 %v298, %v297
    %v319 = vpack.c.b16 %v300, %v299
    %v320 = vpack.c.b16 %v302, %v301
    %v321 = vpack.c.b16 %v304, %v303
    %v322 = vpack.c.b16 %v306, %v305
    %339 = vmatpush.bf16.msra.mxu0 %v314
    %340 = vmatpush.bf16.msra.mxu0 %v313
    %341 = vmatpush.bf16.msra.mxu0 %v312
    %342 = vmatpush.bf16.msra.mxu0 %v311
    %343 = vmatpush.bf16.msra.mxu0 %v310
    %344 = vmatpush.bf16.msra.mxu0 %v309
    %345 = vmatpush.bf16.msra.mxu0 %v308
    %346 = vmatpush.bf16.msra.mxu0 %v307
    %347 = vmatmul.bf16.gmra.mxu0 %v205
    %v348 = vpop.f32.mrf.mxu0
    %v349 = vadd.f32 %v241, %v348
    %v350 = vpop.f32.mrf.mxu0
    %v351 = vadd.f32 %v241, %v350
    %352 = vdwg.mxu0
    %353 = vmatpush.bf16.msra.mxu0 %v322
    %354 = vmatpush.bf16.msra.mxu0 %v321
    %355 = vmatpush.bf16.msra.mxu0 %v320
    %356 = vmatpush.bf16.msra.mxu0 %v319
    %357 = vmatpush.bf16.msra.mxu0 %v318
    %358 = vmatpush.bf16.msra.mxu0 %v317
    %359 = vmatpush.bf16.msra.mxu0 %v316
    %360 = vmatpush.bf16.msra.mxu0 %v315
    %361 = vmatmul.bf16.gmra.mxu0 %v206
    %v362 = vpop.f32.mrf.mxu0
    %v363 = vadd.f32 %v349, %v362
    %v364 = vpop.f32.mrf.mxu0
    %v365 = vadd.f32 %v351, %v364
    %366 = vdwg.mxu0
    %367 = vst [vmem:[#allocation8] sm:$0xff] %v363
    %368 = vst [vmem:[#allocation8 + $0x8] sm:$0xff] %v365
    // Predicated region
    $region34: #{fnn_forward.1} parent=1 // pred_check
      _
    $region35: #{fnn_forward.1} parent=1 // pred_check_branch
      %370 = sbr.rel (0) target = $region37
    $region36: #{fnn_forward.1} parent=1 // pred_region
      %372 = vsyncadd [#allocation4], 0
      %s373 = sshll.u32 [#allocation8], 4
      %s374 = int_to_ptr.vmem [resolvable:$true] %s373
      %s375 = sshll.u32 %s5, 4
      %s376 = int_to_ptr.hbm [resolvable:$true] %s375
      %381 = dma.vmem_to_hbm [thread:$0]  %s374, 256, %s376, [#allocation4], 128, 128, 8
    $region37: #{fnn_forward.1} parent=1 // pred_fallthru
      _
    // Predicated region
    $region38: #{fnn_forward.1} parent=1 // pred_check
      _
    $region39: #{fnn_forward.1} parent=1 // pred_check_branch
      %383 = sbr.rel (0) target = $region41
    $region40: #{fnn_forward.1} parent=1 // pred_region
      %385 = dma.done [#allocation4], 256
    $region41: #{fnn_forward.1} parent=1 // pred_fallthru
      _
    %386 = vsyncpa [#allocation3], 1
    %387 = vsyncpa [#allocation6], 1
    %388 = vsyncpa [#allocation4], 1

</llo_original>
